<compile_context>
chip_gen: v6e
topology: v6e:2x2x1
jax: 0.10.0
libtpu: 0.0.40
codegen_flags: <defaults>
</compile_context>

<pallas_src>
import functools

import jax
import jax.numpy as jnp
from jax.experimental import pallas as pl
from jax.experimental.pallas import tpu as pltpu


def _round_up(a: int, b: int) -> int:
    return (a + b - 1) // b * b


def _vmem_capacity_bytes() -> int:
    try:
        info = pltpu.get_tpu_info()
        cap = getattr(info, "vmem_capacity_bytes", None)
        if cap:
            return int(cap)
    except Exception:
        pass
    return 128 * 1024 * 1024  # v5e/v6e default; v7x reports 64 MiB via the query


# ---------------------------------------------------------------------------
# One-time weight packing (call at model load, NOT per forward).
# ---------------------------------------------------------------------------
def pack_siglu_weights(gate_w, gate_b, up_w, up_b, down_w, down_b, *, tn=512):
    """Pack weights block-major for `siglu_pallas`.

    gate_w/up_w: [H, I], down_w: [I, H] (transpose of nn.Linear weights).
    Biases may be None (mlp_bias=False).  `tn` is the intermediate-dim tile
    (use 512 on v5e/v6e, 256 on v7x).  Returns (guw, gub, dw, db) where
      guw: [nk, Hp, 2*tn]  contiguous [gate | up] weight tile per I-block
      gub: [nk, 1, 2*tn]   fused biases per I-block
      dw : [nk, tn, Hp]    down_proj weight tile per I-block
      db : [1, Hp]         down_proj bias
    """
    H, I = gate_w.shape
    Hp = _round_up(H, 128)
    tn = _round_up(min(tn, _round_up(I, 128)), 128)
    Ip = _round_up(I, tn)
    nk = Ip // tn

    wdt = gate_w.dtype
    if gate_b is None:
        gate_b = jnp.zeros((I,), wdt)
    if up_b is None:
        up_b = jnp.zeros((I,), up_w.dtype)
    if down_b is None:
        down_b = jnp.zeros((H,), down_w.dtype)

    gw = jnp.zeros((Hp, Ip), wdt).at[:H, :I].set(gate_w)
    uw = jnp.zeros((Hp, Ip), up_w.dtype).at[:H, :I].set(up_w)
    gb = jnp.zeros((Ip,), gate_b.dtype).at[:I].set(gate_b)
    ub = jnp.zeros((Ip,), up_b.dtype).at[:I].set(up_b)

    # Block-major: guw[k] = [gate block k | up block k] -> one contiguous DMA.
    guw = jnp.concatenate(
        [gw.reshape(Hp, nk, tn), uw.reshape(Hp, nk, tn)], axis=2
    )                                   # (Hp, nk, 2*tn)
    guw = jnp.transpose(guw, (1, 0, 2))  # (nk, Hp, 2*tn)
    gub = jnp.concatenate(
        [gb.reshape(nk, tn), ub.reshape(nk, tn)], axis=1
    ).reshape(nk, 1, 2 * tn)

    dw = jnp.zeros((Ip, Hp), down_w.dtype).at[:I, :H].set(down_w)
    dw = dw.reshape(nk, tn, Hp)
    db = jnp.zeros((1, Hp), down_b.dtype).at[0, :H].set(down_b)

    return guw, gub, dw, db


# ---------------------------------------------------------------------------
# Kernel
# ---------------------------------------------------------------------------
def siglu_kernel(x_ref, guw_ref, gub_ref, dw_ref, db_ref, o_ref, acc_ref):
    # x_ref  : (tm, Hp)       token tile (same tile across all I steps)
    # guw_ref: (Hp, 2*tn)     fused [gate | up] weight tile for I-block k
    # gub_ref: (1, 2*tn)      fused [gate | up] bias tile for I-block k
    # dw_ref : (tn, Hp)       down_proj weight tile for I-block k
    # db_ref : (1, Hp)        down_proj bias (full)
    # o_ref  : (tm, Hp)       output tile (written once, on the last I step)
    # acc_ref: (tm, Hp) f32   resident down-projection accumulator
    k = pl.program_id(1)

    @pl.when(k == 0)
    def _init():
        acc_ref[...] = jnp.zeros_like(acc_ref)

    x = x_ref[...]

    # One wide matmul for gate+up (keeps the MXU weight pipeline hot).
    gu = jnp.dot(x, guw_ref[...], preferred_element_type=jnp.float32)
    gu = gu + gub_ref[...].astype(jnp.float32)
    tn = gu.shape[1] // 2          # static block size
    g = gu[:, :tn]
    u = gu[:, tn:]

    # SiLU(g) * u in f32 (sigmoid hits the EUP; muls on the VPU).
    h = (g * jax.nn.sigmoid(g)) * u

    # Partial down projection for this I block; accumulate in f32.
    acc_ref[...] += jnp.dot(h.astype(dw_ref.dtype), dw_ref[...],
                            preferred_element_type=jnp.float32)

    @pl.when(k == pl.num_programs(1) - 1)
    def _finalize():
        o_ref[...] = (acc_ref[...] + db_ref[...].astype(jnp.float32)
                      ).astype(o_ref.dtype)


# ---------------------------------------------------------------------------
# Forward wrapper (hot path: activations only; weights are pre-packed)
# ---------------------------------------------------------------------------
@functools.partial(jax.jit, static_argnames=("tm", "vmem_limit_bytes"))
def siglu_pallas(x, guw, gub, dw, db, *, tm=512, vmem_limit_bytes=None):
    """x: [..., H] -> [..., H] with pre-packed weights from pack_siglu_weights."""
    H = x.shape[-1]
    T = 1
    for d in x.shape[:-1]:
        T *= d

    nk, Hp, tn2 = guw.shape
    tn = tn2 // 2
    dtype = x.dtype
    act_b = jnp.dtype(dtype).itemsize
    w_b = jnp.dtype(guw.dtype).itemsize

    # --- token tile: large for weight-stream arithmetic intensity, but keep
    # >= 2 tiles on the "parallel" axis so both v7x TensorCores get work.
    half = _round_up(max(1, (T + 1) // 2), 8)
    tm_eff = max(8, min(tm, half))

    # --- VMEM budget: actual tile footprint + headroom, capped at ~85% phys.
    headroom = 4 * 1024 * 1024
    cap = int(_vmem_capacity_bytes() * 0.85)

    def footprint(tm_, x_bufs):
        return (tm_ * Hp * act_b * x_bufs        # x tile(s)
                + tm_ * Hp * act_b * 2           # output tile (double-buffered)
                + tm_ * Hp * 4                   # f32 accumulator scratch
                + Hp * 2 * tn * w_b * 2          # guw tile (double-buffered)
                + 2 * tn * w_b * 2               # gub tile
                + tn * Hp * w_b * 2              # dw tile (double-buffered)
                + Hp * w_b * 2)                  # db

    x_bufs = 2
    if footprint(tm_eff, x_bufs) + headroom > cap:
        # x block index only changes on the outer token axis; its 2nd buffer
        # buys almost nothing -> reclaim it first (mainly matters on v7x).
        x_bufs = 1
    while footprint(tm_eff, x_bufs) + headroom > cap and tm_eff > 8:
        tm_eff = max(8, _round_up(tm_eff // 2, 8))

    Tp = _round_up(T, tm_eff)
    grid = (Tp // tm_eff, nk)

    if vmem_limit_bytes is None:
        vmem_limit_bytes = min(cap, max(footprint(tm_eff, x_bufs) + headroom,
                                        32 * 1024 * 1024))

    # --- activations: skip the pad copy on the aligned fast path.
    x_flat = x.reshape(T, H)
    aligned = (Tp == T) and (Hp == H)
    if aligned:
        x2 = x_flat
    else:
        x2 = jnp.zeros((Tp, Hp), dtype).at[:T, :H].set(x_flat)

    if x_bufs == 1:
        x_spec = pl.BlockSpec((tm_eff, Hp), lambda i, k: (i, 0),
                              pipeline_mode=pl.Buffered(1))
    else:
        x_spec = pl.BlockSpec((tm_eff, Hp), lambda i, k: (i, 0))

    out2 = pl.pallas_call(
        siglu_kernel,
        out_shape=jax.ShapeDtypeStruct((Tp, Hp), dtype),
        grid_spec=pltpu.PrefetchScalarGridSpec(
            num_scalar_prefetch=0,
            grid=grid,
            in_specs=[
                x_spec,                                                 # x tile
                pl.BlockSpec((None, Hp, 2 * tn), lambda i, k: (k, 0, 0)),  # gate|up W
                pl.BlockSpec((None, 1, 2 * tn), lambda i, k: (k, 0, 0)),   # gate|up b
                pl.BlockSpec((None, tn, Hp), lambda i, k: (k, 0, 0)),      # down W
                pl.BlockSpec((1, Hp), lambda i, k: (0, 0)),                # down b
            ],
            out_specs=pl.BlockSpec((tm_eff, Hp), lambda i, k: (i, 0)),
            scratch_shapes=[pltpu.VMEM((tm_eff, Hp), jnp.float32)],
        ),
        compiler_params=pltpu.CompilerParams(
            dimension_semantics=("parallel", "arbitrary"),
            vmem_limit_bytes=vmem_limit_bytes,
        ),
    )(x2, guw, gub, dw, db)

    if aligned:
        return out2.reshape(x.shape)
    return out2[:T, :H].reshape(x.shape)


# ---------------------------------------------------------------------------
# Reference + test
# ---------------------------------------------------------------------------
def siglu_ref(x, gate_w, gate_b, up_w, up_b, down_w, down_b):
    g = x @ gate_w + gate_b
    u = x @ up_w + up_b
    h = jax.nn.silu(g) * u
    return h @ down_w + down_b


if __name__ == "__main__":
    # Small shapes: batch=2, seq=8, hidden=32, intermediate=64, mlp_bias=True
    B, S, H, I = 2, 8, 32, 64
    key = jax.random.PRNGKey(0)
    kx, k1, k2, k3, k4, k5, k6 = jax.random.split(key, 7)

    # Deterministic init (PyTorch-style uniform(-1/sqrt(fan_in), 1/sqrt(fan_in)))
    def init_w(k, fan_in, shape):
        bound = 1.0 / (fan_in ** 0.5)
        return jax.random.uniform(k, shape, jnp.float32, -bound, bound)

    x = jax.random.normal(kx, (B, S, H), jnp.float32)
    gate_w = init_w(k1, H, (H, I))   # stored [in, out] (nn.Linear weight.T)
    gate_b = init_w(k2, H, (I,))
    up_w   = init_w(k3, H, (H, I))
    up_b   = init_w(k4, H, (I,))
    down_w = init_w(k5, I, (I, H))
    down_b = init_w(k6, I, (H,))

    # Pack ONCE (model-load time), then run the hot path with packed weights.
    packed = pack_siglu_weights(gate_w, gate_b, up_w, up_b, down_w, down_b,
                                tn=512)
    packed = jax.tree_util.tree_map(jax.block_until_ready, packed)

    out = siglu_pallas(x, *packed)
    out = jax.block_until_ready(out)

    ref = siglu_ref(x, gate_w, gate_b, up_w, up_b, down_w, down_b)
    assert out.shape == (B, S, H)
    assert jnp.allclose(out, ref, atol=1e-4, rtol=1e-4), "mismatch vs JAX reference"

    print("KERNEL_OK")
</pallas_src>

<mosaic_0001>
module attributes {stable_mosaic.version = 11 : i64} {
  func.func @siglu_kernel(%arg0: i32, %arg1: i32, %arg2: memref<8x128xf32, #tpu.memory_space<vmem>>, %arg3: memref<1x128x256xf32, #tpu.memory_space<vmem>>, %arg4: memref<1x1x256xf32, #tpu.memory_space<vmem>>, %arg5: memref<1x128x128xf32, #tpu.memory_space<vmem>>, %arg6: memref<1x128xf32, #tpu.memory_space<vmem>>, %arg7: memref<8x128xf32, #tpu.memory_space<vmem>>, %arg8: memref<8x128xf32, #tpu.memory_space<vmem>>) attributes {dimension_semantics = [#tpu.dimension_semantics<parallel>, #tpu.dimension_semantics<arbitrary>], iteration_bounds = array<i64: 2, 1>, scalar_prefetch = 0 : i64, scratch_operands = 1 : i64, tpu.core_type = #tpu.core_type<tc>, window_params = [{transform_indices = @transform_0, window_bounds = array<i64: 8, 128>}, {transform_indices = @transform_1, window_bounds = array<i64: 1, 128, 256>}, {transform_indices = @transform_2, window_bounds = array<i64: 1, 1, 256>}, {transform_indices = @transform_3, window_bounds = array<i64: 1, 128, 128>}, {pipeline_mode = #tpu.pipeline_mode<synchronous>, transform_indices = @transform_4, window_bounds = array<i64: 1, 128>}, {transform_indices = @transform_5, window_bounds = array<i64: 8, 128>}]} {
    %c0_i32 = arith.constant 0 : i32
    %0 = arith.cmpi eq, %arg1, %c0_i32 : i32
    %1 = arith.extui %0 : i1 to i32
    %c0_i32_0 = arith.constant 0 : i32
    %2 = arith.cmpi ne, %1, %c0_i32_0 : i32
    scf.if %2 {
      %cst_19 = arith.constant 0.000000e+00 : f32
      %29 = vector.broadcast %cst_19 : f32 to vector<8x128xf32>
      %c0_20 = arith.constant 0 : index
      %c0_21 = arith.constant 0 : index
      %30 = vector.load %arg8[%c0_20, %c0_21] : memref<8x128xf32, #tpu.memory_space<vmem>>, vector<8x128xf32>
      tpu.vector_store %arg8[%c0_20, %c0_21], %29 {strides = array<i32>} : memref<8x128xf32, #tpu.memory_space<vmem>>, vector<8x128xf32>,
    } else {
    }
    %c0 = arith.constant 0 : index
    %c0_1 = arith.constant 0 : index
    %3 = vector.load %arg2[%c0, %c0_1] : memref<8x128xf32, #tpu.memory_space<vmem>>, vector<8x128xf32>
    %c0_2 = arith.constant 0 : index
    %c0_3 = arith.constant 0 : index
    %c0_4 = arith.constant 0 : index
    %4 = vector.load %arg3[%c0_2, %c0_3, %c0_4] : memref<1x128x256xf32, #tpu.memory_space<vmem>>, vector<1x128x256xf32>
    %5 = vector.shape_cast %4 : vector<1x128x256xf32> to vector<128x256xf32>
    %cst = arith.constant dense<0.000000e+00> : vector<8x256xf32>
    %6 = tpu.matmul %3, %5, %cst {dimension_numbers = #tpu.dot_dimension_numbers<[1], [0], [0], [1], [0, 0, 1, 1], [], []>} : vector<8x128xf32>, vector<128x256xf32>, vector<8x256xf32> -> vector<8x256xf32>
    %c0_5 = arith.constant 0 : index
    %c0_6 = arith.constant 0 : index
    %c0_7 = arith.constant 0 : index
    %7 = vector.load %arg4[%c0_5, %c0_6, %c0_7] : memref<1x1x256xf32, #tpu.memory_space<vmem>>, vector<1x1x256xf32>
    %8 = vector.shape_cast %7 : vector<1x1x256xf32> to vector<1x256xf32>
    %9 = vector.broadcast %8 : vector<1x256xf32> to vector<8x256xf32>
    %10 = arith.addf %6, %9 : vector<8x256xf32>
    %11 = vector.extract_strided_slice %10 {offsets = [0, 0], sizes = [8, 128], strides = [1, 1]} : vector<8x256xf32> to vector<8x128xf32>
    %12 = vector.extract_strided_slice %10 {offsets = [0, 128], sizes = [8, 128], strides = [1, 1]} : vector<8x256xf32> to vector<8x128xf32>
    %13 = arith.negf %11 : vector<8x128xf32>
    %14 = math.exp %13 : vector<8x128xf32>
    %cst_8 = arith.constant 1.000000e+00 : f32
    %15 = vector.broadcast %cst_8 : f32 to vector<8x128xf32>
    %16 = arith.addf %15, %14 : vector<8x128xf32>
    %17 = arith.divf %15, %16 : vector<8x128xf32>
    %18 = arith.mulf %11, %17 : vector<8x128xf32>
    %19 = arith.mulf %18, %12 : vector<8x128xf32>
    %c0_9 = arith.constant 0 : index
    %c0_10 = arith.constant 0 : index
    %20 = vector.load %arg8[%c0_9, %c0_10] : memref<8x128xf32, #tpu.memory_space<vmem>>, vector<8x128xf32>
    %c0_11 = arith.constant 0 : index
    %c0_12 = arith.constant 0 : index
    %c0_13 = arith.constant 0 : index
    %21 = vector.load %arg5[%c0_11, %c0_12, %c0_13] : memref<1x128x128xf32, #tpu.memory_space<vmem>>, vector<1x128x128xf32>
    %22 = vector.shape_cast %21 : vector<1x128x128xf32> to vector<128x128xf32>
    %cst_14 = arith.constant dense<0.000000e+00> : vector<8x128xf32>
    %23 = tpu.matmul %19, %22, %cst_14 {dimension_numbers = #tpu.dot_dimension_numbers<[1], [0], [0], [1], [0, 0, 1, 1], [], []>} : vector<8x128xf32>, vector<128x128xf32>, vector<8x128xf32> -> vector<8x128xf32>
    %24 = arith.addf %20, %23 : vector<8x128xf32>
    %c0_15 = arith.constant 0 : index
    %c0_16 = arith.constant 0 : index
    %25 = vector.load %arg8[%c0_15, %c0_16] : memref<8x128xf32, #tpu.memory_space<vmem>>, vector<8x128xf32>
    tpu.vector_store %arg8[%c0_15, %c0_16], %24 {strides = array<i32>} : memref<8x128xf32, #tpu.memory_space<vmem>>, vector<8x128xf32>,
    %c0_i32_17 = arith.constant 0 : i32
    %26 = arith.cmpi eq, %arg1, %c0_i32_17 : i32
    %27 = arith.extui %26 : i1 to i32
    %c0_i32_18 = arith.constant 0 : i32
    %28 = arith.cmpi ne, %27, %c0_i32_18 : i32
    scf.if %28 {
      %c0_19 = arith.constant 0 : index
      %c0_20 = arith.constant 0 : index
      %29 = vector.load %arg8[%c0_19, %c0_20] : memref<8x128xf32, #tpu.memory_space<vmem>>, vector<8x128xf32>
      %c0_21 = arith.constant 0 : index
      %c0_22 = arith.constant 0 : index
      %30 = vector.load %arg6[%c0_21, %c0_22] : memref<1x128xf32, #tpu.memory_space<vmem>>, vector<1x128xf32>
      %31 = vector.broadcast %30 : vector<1x128xf32> to vector<8x128xf32>
      %32 = arith.addf %29, %31 : vector<8x128xf32>
      %c0_23 = arith.constant 0 : index
      %c0_24 = arith.constant 0 : index
      %33 = vector.load %arg7[%c0_23, %c0_24] : memref<8x128xf32, #tpu.memory_space<vmem>>, vector<8x128xf32>
      tpu.vector_store %arg7[%c0_23, %c0_24], %32 {strides = array<i32>} : memref<8x128xf32, #tpu.memory_space<vmem>>, vector<8x128xf32>,
    } else {
    }
    return
  }
  func.func @transform_0(%arg0: i32, %arg1: i32) -> (i32, i32) {
    %c0_i32 = arith.constant 0 : i32
    %c0_i32_0 = arith.constant 0 : i32
    return %arg0, %c0_i32 : i32, i32
  }
  func.func @transform_1(%arg0: i32, %arg1: i32) -> (i32, i32, i32) {
    %c0_i32 = arith.constant 0 : i32
    %c0_i32_0 = arith.constant 0 : i32
    %c0_i32_1 = arith.constant 0 : i32
    return %arg1, %c0_i32, %c0_i32_0 : i32, i32, i32
  }
  func.func @transform_2(%arg0: i32, %arg1: i32) -> (i32, i32, i32) {
    %c0_i32 = arith.constant 0 : i32
    %c0_i32_0 = arith.constant 0 : i32
    %c0_i32_1 = arith.constant 0 : i32
    return %arg1, %c0_i32, %c0_i32_0 : i32, i32, i32
  }
  func.func @transform_3(%arg0: i32, %arg1: i32) -> (i32, i32, i32) {
    %c0_i32 = arith.constant 0 : i32
    %c0_i32_0 = arith.constant 0 : i32
    %c0_i32_1 = arith.constant 0 : i32
    return %arg1, %c0_i32, %c0_i32_0 : i32, i32, i32
  }
  func.func @transform_4(%arg0: i32, %arg1: i32) -> (i32, i32) {
    %c0_i32 = arith.constant 0 : i32
    %c0_i32_0 = arith.constant 0 : i32
    %c0_i32_1 = arith.constant 0 : i32
    return %c0_i32, %c0_i32_0 : i32, i32
  }
  func.func @transform_5(%arg0: i32, %arg1: i32) -> (i32, i32) {
    %c0_i32 = arith.constant 0 : i32
    %c0_i32_0 = arith.constant 0 : i32
    return %arg0, %c0_i32 : i32, i32
  }
}

</mosaic_0001>

<llo_original>
// kernel: siglu_pallas.1
$region0: #{siglu_pallas.1}
  #allocation0 [shape = 'u32[]', space=smem, size = 0x4, offset = 0x4, fixed_abs, tag = 'smem constant byte address 0x4 - core index']
  #allocation1 [shape = 'u32[144,128]{1,0:T(1,128)}', space=vmem, size = 0x12000, scoped, tag = 'internal scratch']
  #allocation2 [shape = 'f32[8,128]{1,0:T(8,128)}', space=vmem, size = 0x1000, scoped, tag = 'scratch operand']
  %s0 = inlined_call_operand.vmem [shape: f32[16,128], index: 0, kind: input, shape index: {}]
  %s1 = inlined_call_operand.hbm [shape: f32[1,128,256], index: 1, kind: input, shape index: {}]
  %s2 = inlined_call_operand.vmem [shape: f32[1,1,256], index: 2, kind: input, shape index: {}]
  %s3 = inlined_call_operand.hbm [shape: f32[1,128,128], index: 3, kind: input, shape index: {}]
  %s4 = inlined_call_operand.vmem [shape: f32[1,128], index: 4, kind: input, shape index: {}]
  %s5 = inlined_call_operand.vmem [shape: f32[16,128], index: 5, kind: output, shape index: {}]
  %s6 = sld [smem:[#allocation0]]
  $region69: #{siglu_pallas.1} parent=0
    _
  %s8 = ssub.s32 1, %s6
  %s9 = scalar_select 0, %s8, %s6
  $region1: #{siglu_pallas.1} parent=0
    #allocation3 [shape = 'u8[131072]{0}', space=vmem, size = 0x20000, scoped, tag = 'input window, operand 1, single buffered']
    #allocation4 [shape = 's32[2]{0}', space=sflag, size = 0x8, scoped, tag = 'scoped memory for siglu_pallas.1']
    #allocation5 [shape = 'u8[65536]{0}', space=vmem, size = 0x10000, scoped, tag = 'input window, operand 3, single buffered']
    #allocation6 [shape = 's32[1]{0}', space=sflag, size = 0x4, scoped, tag = 'scoped memory for siglu_pallas.1']
    %10 = vsyncpa [#allocation4], 0
    %11 = vsyncpa [#allocation6], 0
    loop: start=0, step=1, limit=4
    $region2: #{siglu_pallas.1} parent=1 // loop_pre_header
      _
    $region3: #{siglu_pallas.1} parent=1 // loop_header
      %s13 = sphi 0, %s17
      %p14 = scmp.ge.s32.totalorder %s13, 4
      %s20 = sphi 0, %s32
      %s21 = sphi 0, %s28
      %s22 = sphi 0, %s20
      %s23 = sphi 0, %s21
      %s24 = sphi 0, %s22
      %s25 = sphi 0, %s23
      %s35 = sphi 0, %s37
      %s38 = sphi 0, %s35
      %s39 = sphi 0, %s38
      %s55 = sphi 0, %s39
      %s61 = sphi 0, %s63
      %s64 = sphi 0, %s61
      %s65 = sphi 0, %s64
      %s81 = sphi 0, %s65
      %s87 = sphi 0, %s89
      %s90 = sphi 0, %s87
      %s91 = sphi 0, %s90
      %s107 = sphi 0, %s91
      %s113 = sphi 0, %s115
      %s116 = sphi 0, %s113
      %s117 = sphi 0, %s116
      %s133 = sphi 0, %s117
      %s137 = sphi 0, %s137
      %s139 = sphi 0, %s137
      %s140 = sphi 0, %s139
      %s154 = sphi 0, %s140
      %s160 = sphi 0, %s162
      %s163 = sphi 0, %s160
      %s164 = sphi 0, %s163
      %s180 = sphi 0, %s164
    $region4: #{siglu_pallas.1} parent=1 // loop_header_branch
      %16 = sbr.rel (%p14) target = $region8
    $region5: #{siglu_pallas.1} parent=1 // loop_body
      %s18 = ssub.s32 %s13, 1
      %s19 = ssub.s32 %s13, 2
      %s26 = sadd.s32 1, %s21
      %p27 = scmp.ge.s32.totalorder %s26, 1
      %s28 = scalar_select %p27, 0, %s26
      %s29 = sadd.s32 1, %s20
      %s30 = scalar_select %p27, %s29, %s20
      %p31 = scmp.ge.s32.totalorder %s30, 2
      %s32 = scalar_select %p31, 0, %s30
      %s33 = ssub.s32 %s20, %s32
      %p34 = scmp.eq.s32.totalorder %s33, 0
      %s36 = sadd.s32 %s35, 1
      %s37 = scalar_select %p34, %s35, %s36
      %p40 = pneg %p34
      %p41 = scmp.eq.s32.totalorder %s13, 1
      %p42 = por %p40, %p41
      %p43 = scmp.ne.s32.totalorder %s35, %s38
      %p44 = scmp.eq.s32.totalorder %s13, 0
      %p45 = por %p43, %p44
      %p46 = scmp.ne.s32.totalorder %s35, %s38
      %p47 = scmp.eq.s32.totalorder %s18, 1
      %p48 = por %p46, %p47
      %p49 = scmp.ne.s32.totalorder %s38, %s39
      %p50 = scmp.eq.s32.totalorder %s18, 0
      %p51 = por %p49, %p50
      %p52 = scmp.ne.s32.totalorder %s38, %s39
      %p53 = scmp.eq.s32.totalorder %s19, 1
      %p54 = por %p52, %p53
      %p56 = scmp.ne.s32.totalorder %s39, %s55
      %p57 = scmp.eq.s32.totalorder %s19, 0
      %p58 = por %p56, %p57
      %s59 = ssub.s32 %s21, %s28
      %p60 = scmp.eq.s32.totalorder %s59, 0
      %s62 = sadd.s32 %s61, 1
      %s63 = scalar_select %p60, %s61, %s62
      %p66 = pneg %p60
      %p67 = scmp.eq.s32.totalorder %s13, 1
      %p68 = por %p66, %p67
      %p69 = scmp.ne.s32.totalorder %s61, %s64
      %p70 = scmp.eq.s32.totalorder %s13, 0
      %p71 = por %p69, %p70
      %p72 = scmp.ne.s32.totalorder %s61, %s64
      %p73 = scmp.eq.s32.totalorder %s18, 1
      %p74 = por %p72, %p73
      %p75 = scmp.ne.s32.totalorder %s64, %s65
      %p76 = scmp.eq.s32.totalorder %s18, 0
      %p77 = por %p75, %p76
      %p78 = scmp.ne.s32.totalorder %s64, %s65
      %p79 = scmp.eq.s32.totalorder %s19, 1
      %p80 = por %p78, %p79
      %p82 = scmp.ne.s32.totalorder %s65, %s81
      %p83 = scmp.eq.s32.totalorder %s19, 0
      %p84 = por %p82, %p83
      %s85 = ssub.s32 %s21, %s28
      %p86 = scmp.eq.s32.totalorder %s85, 0
      %s88 = sadd.s32 %s87, 1
      %s89 = scalar_select %p86, %s87, %s88
      %p92 = pneg %p86
      %p93 = scmp.eq.s32.totalorder %s13, 1
      %p94 = por %p92, %p93
      %p95 = scmp.ne.s32.totalorder %s87, %s90
      %p96 = scmp.eq.s32.totalorder %s13, 0
      %p97 = por %p95, %p96
      %p98 = scmp.ne.s32.totalorder %s87, %s90
      %p99 = scmp.eq.s32.totalorder %s18, 1
      %p100 = por %p98, %p99
      %p101 = scmp.ne.s32.totalorder %s90, %s91
      %p102 = scmp.eq.s32.totalorder %s18, 0
      %p103 = por %p101, %p102
      %p104 = scmp.ne.s32.totalorder %s90, %s91
      %p105 = scmp.eq.s32.totalorder %s19, 1
      %p106 = por %p104, %p105
      %p108 = scmp.ne.s32.totalorder %s91, %s107
      %p109 = scmp.eq.s32.totalorder %s19, 0
      %p110 = por %p108, %p109
      %s111 = ssub.s32 %s21, %s28
      %p112 = scmp.eq.s32.totalorder %s111, 0
      %s114 = sadd.s32 %s113, 1
      %s115 = scalar_select %p112, %s113, %s114
      %p118 = pneg %p112
      %p119 = scmp.eq.s32.totalorder %s13, 1
      %p120 = por %p118, %p119
      %p121 = scmp.ne.s32.totalorder %s113, %s116
      %p122 = scmp.eq.s32.totalorder %s13, 0
      %p123 = por %p121, %p122
      %p124 = scmp.ne.s32.totalorder %s113, %s116
      %p125 = scmp.eq.s32.totalorder %s18, 1
      %p126 = por %p124, %p125
      %p127 = scmp.ne.s32.totalorder %s116, %s117
      %p128 = scmp.eq.s32.totalorder %s18, 0
      %p129 = por %p127, %p128
      %p130 = scmp.ne.s32.totalorder %s116, %s117
      %p131 = scmp.eq.s32.totalorder %s19, 1
      %p132 = por %p130, %p131
      %p134 = scmp.ne.s32.totalorder %s117, %s133
      %p135 = scmp.eq.s32.totalorder %s19, 0
      %p136 = por %p134, %p135
      %s138 = sadd.s32 %s137, 1
      %p141 = scmp.eq.s32.totalorder %s13, 1
      %p142 = scmp.ne.s32.totalorder %s137, %s139
      %p143 = scmp.eq.s32.totalorder %s13, 0
      %p144 = por %p142, %p143
      %p145 = scmp.ne.s32.totalorder %s137, %s139
      %p146 = scmp.eq.s32.totalorder %s18, 1
      %p147 = por %p145, %p146
      %p148 = scmp.ne.s32.totalorder %s139, %s140
      %p149 = scmp.eq.s32.totalorder %s18, 0
      %p150 = por %p148, %p149
      %p151 = scmp.ne.s32.totalorder %s139, %s140
      %p152 = scmp.eq.s32.totalorder %s19, 1
      %p153 = por %p151, %p152
      %p155 = scmp.ne.s32.totalorder %s140, %s154
      %p156 = scmp.eq.s32.totalorder %s19, 0
      %p157 = por %p155, %p156
      %s158 = ssub.s32 %s20, %s32
      %p159 = scmp.eq.s32.totalorder %s158, 0
      %s161 = sadd.s32 %s160, 1
      %s162 = scalar_select %p159, %s160, %s161
      %p165 = pneg %p159
      %p166 = scmp.eq.s32.totalorder %s13, 1
      %p167 = por %p165, %p166
      %p168 = scmp.ne.s32.totalorder %s160, %s163
      %p169 = scmp.eq.s32.totalorder %s13, 0
      %p170 = por %p168, %p169
      %p171 = scmp.ne.s32.totalorder %s160, %s163
      %p172 = scmp.eq.s32.totalorder %s18, 1
      %p173 = por %p171, %p172
      %p174 = scmp.ne.s32.totalorder %s163, %s164
      %p175 = scmp.eq.s32.totalorder %s18, 0
      %p176 = por %p174, %p175
      %p177 = scmp.ne.s32.totalorder %s163, %s164
      %p178 = scmp.eq.s32.totalorder %s19, 1
      %p179 = por %p177, %p178
      %p181 = scmp.ne.s32.totalorder %s164, %s180
      %p182 = scmp.eq.s32.totalorder %s19, 0
      %p183 = por %p181, %p182
      %p184 = scmp.le.s32.totalorder 1, %s13
      %p185 = scmp.lt.s32.totalorder %s13, 3
      %p186 = pnand %p184, %p185
      %p187 = pneg %p186
      // Predicated region
      $region9: #{siglu_pallas.1} parent=5 // pred_check
        _
      $region10: #{siglu_pallas.1} parent=5 // pred_check_branch
        %189 = sbr.rel (%p186) target = $region12
      $region11: #{siglu_pallas.1} parent=5 // pred_region
        %s190 = ssub.s32 %s13, 1
        // Predicated region
        $region13: #{siglu_pallas.1} parent=11 // pred_check
          %p191 = pneg %p77
        $region14: #{siglu_pallas.1} parent=11 // pred_check_branch
          %193 = sbr.rel (%p191) target = $region16
        $region15: #{siglu_pallas.1} parent=11 // pred_region
          %s195 = ssub.s32 4096, 4096
          %196 = vsyncadd [#allocation4], %s195
          %s197 = smul.addr %s23, 32
          %s198 = smul.addr %s197, 128
          %s199 = scalar_lea.hbm %s1, %s198
          %s200 = sshll.u32 [#allocation3], 4
          %s201 = int_to_ptr.vmem [resolvable:$true] %s200
          %206 = dma.hbm_to_vmem [thread:$0]  %s199, 4096, %s201, [#allocation4], 256, 256, 16
        $region16: #{siglu_pallas.1} parent=11 // pred_fallthru
          _
        // Predicated region
        $region17: #{siglu_pallas.1} parent=11 // pred_check
          %p207 = pneg %p103
        $region18: #{siglu_pallas.1} parent=11 // pred_check_branch
          %209 = sbr.rel (%p207) target = $region20
        $region19: #{siglu_pallas.1} parent=11 // pred_region
          %p210 = scmp.lt.s32.totalorder %s23, 0
          %s211 = scalar_select %p210, %s23, 0
          %s212 = smul.addr %s211, 2
          %s213 = scalar_lea.vmem %s2, %s212
        $region20: #{siglu_pallas.1} parent=11 // pred_fallthru
          _
        // Predicated region
        $region21: #{siglu_pallas.1} parent=11 // pred_check
          %p214 = pneg %p129
        $region22: #{siglu_pallas.1} parent=11 // pred_check_branch
          %216 = sbr.rel (%p214) target = $region24
        $region23: #{siglu_pallas.1} parent=11 // pred_region
          %s218 = ssub.s32 2048, 2048
          %219 = vsyncadd [#allocation6], %s218
          %s220 = smul.addr %s23, 16
          %s221 = smul.addr %s220, 128
          %s222 = scalar_lea.hbm %s3, %s221
          %s223 = sshll.u32 [#allocation5], 4
          %s224 = int_to_ptr.vmem [resolvable:$true] %s223
          %229 = dma.hbm_to_vmem [thread:$0]  %s222, 2048, %s224, [#allocation6], 128, 128, 8
        $region24: #{siglu_pallas.1} parent=11 // pred_fallthru
          _
        // Predicated region
        $region25: #{siglu_pallas.1} parent=11 // pred_check
          %p230 = pneg %p150
        $region26: #{siglu_pallas.1} parent=11 // pred_check_branch
          %232 = sbr.rel (%p230) target = $region28
        $region27: #{siglu_pallas.1} parent=11 // pred_region
          _
        $region28: #{siglu_pallas.1} parent=11 // pred_fallthru
          _
      $region12: #{siglu_pallas.1} parent=5 // pred_fallthru
        _
      %p233 = scmp.lt.s32.totalorder %s13, 2
      // Predicated region
      $region29: #{siglu_pallas.1} parent=5 // pred_check
        %p234 = pneg %p233
      $region30: #{siglu_pallas.1} parent=5 // pred_check_branch
        %236 = sbr.rel (%p234) target = $region32
      $region31: #{siglu_pallas.1} parent=5 // pred_region
        // Predicated region
        $region33: #{siglu_pallas.1} parent=31 // pred_check
          %p237 = pneg %p45
        $region34: #{siglu_pallas.1} parent=31 // pred_check_branch
          %239 = sbr.rel (%p237) target = $region36
        $region35: #{siglu_pallas.1} parent=31 // pred_region
          %p240 = scmp.lt.s32.totalorder %s20, 1
          %s241 = scalar_select %p240, %s20, 1
          %s242 = smul.addr %s241, 8
          %s243 = scalar_lea.vmem %s0, %s242
        $region36: #{siglu_pallas.1} parent=31 // pred_fallthru
          _
      $region32: #{siglu_pallas.1} parent=5 // pred_fallthru
        _
      %p244 = scmp.le.s32.totalorder 1, %s13
      %p245 = scmp.lt.s32.totalorder %s13, 3
      %p246 = pnand %p244, %p245
      %p247 = pneg %p246
      // Predicated region
      $region37: #{siglu_pallas.1} parent=5 // pred_check
        _
      $region38: #{siglu_pallas.1} parent=5 // pred_check_branch
        %249 = sbr.rel (%p246) target = $region40
      $region39: #{siglu_pallas.1} parent=5 // pred_region
        %s250 = ssub.s32 %s13, 1
        // Predicated region
        $region41: #{siglu_pallas.1} parent=39 // pred_check
          %p251 = pneg %p77
        $region42: #{siglu_pallas.1} parent=39 // pred_check_branch
          %253 = sbr.rel (%p251) target = $region44
        $region43: #{siglu_pallas.1} parent=39 // pred_region
          %254 = dma.done [#allocation4], 4096
        $region44: #{siglu_pallas.1} parent=39 // pred_fallthru
          _
        // Predicated region
        $region45: #{siglu_pallas.1} parent=39 // pred_check
          %p255 = pneg %p129
        $region46: #{siglu_pallas.1} parent=39 // pred_check_branch
          %257 = sbr.rel (%p255) target = $region48
        $region47: #{siglu_pallas.1} parent=39 // pred_region
          %258 = dma.done [#allocation6], 2048
        $region48: #{siglu_pallas.1} parent=39 // pred_fallthru
          _
        %p259 = scmp.lt.s32.totalorder %s22, 1
        %s260 = scalar_select %p259, %s22, 1
        %s261 = smul.addr %s260, 8
        %s262 = scalar_lea.vmem %s0, %s261
        %p263 = pneg %p51
        %p264 = pneg %p48
        %p265 = pneg %p77
        %p266 = pneg %p74
        %p267 = scmp.lt.s32.totalorder %s23, 0
        %s268 = scalar_select %p267, %s23, 0
        %s269 = smul.addr %s268, 2
        %s270 = scalar_lea.vmem %s2, %s269
        %p271 = pneg %p103
        %p272 = pneg %p100
        %p273 = pneg %p129
        %p274 = pneg %p126
        %p275 = pneg %p150
        %p276 = pneg %p147
        %p277 = pneg %p176
        %p278 = pneg %p173
        %p279 = scmp.lt.s32.totalorder %s22, 1
        %s280 = scalar_select %p279, %s22, 1
        %s281 = smul.addr %s280, 8
        %s282 = scalar_lea.vmem %s5, %s281
        %p283 = scmp.lt.s32.totalorder %s22, 1
        %s284 = scalar_select %p283, %s22, 1
        %s285 = smul.addr %s284, 8
        %s286 = scalar_lea.vmem %s0, %s285
        %p287 = scmp.lt.s32.totalorder %s23, 0
        %s288 = scalar_select %p287, %s23, 0
        %s289 = smul.addr %s288, 2
        %s290 = scalar_lea.vmem %s2, %s289
        %p291 = scmp.lt.s32.totalorder %s22, 1
        %s292 = scalar_select %p291, %s22, 1
        %s293 = smul.addr %s292, 8
        %s294 = scalar_lea.vmem %s5, %s293
        %p295 = scmp.eq.s32.totalorder %s23, 0
        // Predicated region
        $region49: #{siglu_pallas.1} parent=39 // pred_check
          %p296 = pneg %p295
        $region50: #{siglu_pallas.1} parent=39 // pred_check_branch
          %298 = sbr.rel (%p296) target = $region52
        $region51: #{siglu_pallas.1} parent=39 // pred_region
          %299 = vst [vmem:[#allocation2] sm:$0xff] 0.0
        $region52: #{siglu_pallas.1} parent=39 // pred_fallthru
          _
        %v300 = vld [vmem:[%s286] sm:$0xff]
        %v301 = vld [vmem:[#allocation3] sm:$0xff]
        %v302 = vld [vmem:[#allocation3 + $0x8] sm:$0xff]
        %v303 = vld [vmem:[#allocation3 + $0x10] sm:$0xff]
        %v304 = vld [vmem:[#allocation3 + $0x18] sm:$0xff]
        %v305 = vld [vmem:[#allocation3 + $0x20] sm:$0xff]
        %v306 = vld [vmem:[#allocation3 + $0x28] sm:$0xff]
        %v307 = vld [vmem:[#allocation3 + $0x30] sm:$0xff]
        %v308 = vld [vmem:[#allocation3 + $0x38] sm:$0xff]
        %v309 = vld [vmem:[#allocation3 + $0x40] sm:$0xff]
        %v310 = vld [vmem:[#allocation3 + $0x48] sm:$0xff]
        %v311 = vld [vmem:[#allocation3 + $0x50] sm:$0xff]
        %v312 = vld [vmem:[#allocation3 + $0x58] sm:$0xff]
        %v313 = vld [vmem:[#allocation3 + $0x60] sm:$0xff]
        %v314 = vld [vmem:[#allocation3 + $0x68] sm:$0xff]
        %v315 = vld [vmem:[#allocation3 + $0x70] sm:$0xff]
        %v316 = vld [vmem:[#allocation3 + $0x78] sm:$0xff]
        %v317 = vld [vmem:[#allocation3 + $0x80] sm:$0xff]
        %v318 = vld [vmem:[#allocation3 + $0x88] sm:$0xff]
        %v319 = vld [vmem:[#allocation3 + $0x90] sm:$0xff]
        %v320 = vld [vmem:[#allocation3 + $0x98] sm:$0xff]
        %v321 = vld [vmem:[#allocation3 + $0xa0] sm:$0xff]
        %v322 = vld [vmem:[#allocation3 + $0xa8] sm:$0xff]
        %v323 = vld [vmem:[#allocation3 + $0xb0] sm:$0xff]
        %v324 = vld [vmem:[#allocation3 + $0xb8] sm:$0xff]
        %v325 = vld [vmem:[#allocation3 + $0xc0] sm:$0xff]
        %v326 = vld [vmem:[#allocation3 + $0xc8] sm:$0xff]
        %v327 = vld [vmem:[#allocation3 + $0xd0] sm:$0xff]
        %v328 = vld [vmem:[#allocation3 + $0xd8] sm:$0xff]
        %v329 = vld [vmem:[#allocation3 + $0xe0] sm:$0xff]
        %v330 = vld [vmem:[#allocation3 + $0xe8] sm:$0xff]
        %v331 = vld [vmem:[#allocation3 + $0xf0] sm:$0xff]
        %v332 = vld [vmem:[#allocation3 + $0xf8] sm:$0xff]
        %v333 = vld [vmem:[%s290] sm:$0x3]
        %v335 = vlaneseq
        %v336 = vshrl.u32 %v335, 7
        %v337 = vsub.s32 0, %v336
        %v338 = vrot.slane %v333, %v337
        %v339 = vlaneseq
        %v340 = vshrl.u32 %v339, 7
        %v341 = vsub.s32 1, %v340
        %v342 = vrot.slane %v333, %v341
        %345 = vmatprep.subr.mxu0 %v332
        %346 = vmatpush1.msra.mxu0 %v331
        %347 = vmatprep.subr.mxu0 %v330
        %348 = vmatpush1.msra.mxu0 %v329
        %349 = vmatprep.subr.mxu0 %v328
        %350 = vmatpush1.msra.mxu0 %v327
        %351 = vmatprep.subr.mxu0 %v326
        %352 = vmatpush1.msra.mxu0 %v325
        %353 = vmatprep.subr.mxu0 %v324
        %354 = vmatpush1.msra.mxu0 %v323
        %355 = vmatprep.subr.mxu0 %v322
        %356 = vmatpush1.msra.mxu0 %v321
        %357 = vmatprep.subr.mxu0 %v320
        %358 = vmatpush1.msra.mxu0 %v319
        %359 = vmatprep.subr.mxu0 %v318
        %360 = vmatpush1.msra.mxu0 %v317
        %361 = vmatprep.subr.mxu0 %v316
        %362 = vmatpush1.msra.mxu0 %v315
        %363 = vmatprep.subr.mxu0 %v314
        %364 = vmatpush1.msra.mxu0 %v313
        %365 = vmatprep.subr.mxu0 %v312
        %366 = vmatpush1.msra.mxu0 %v311
        %367 = vmatprep.subr.mxu0 %v310
        %368 = vmatpush1.msra.mxu0 %v309
        %369 = vmatprep.subr.mxu0 %v308
        %370 = vmatpush1.msra.mxu0 %v307
        %371 = vmatprep.subr.mxu0 %v306
        %372 = vmatpush1.msra.mxu0 %v305
        %373 = vmatprep.subr.mxu0 %v304
        %374 = vmatpush1.msra.mxu0 %v303
        %375 = vmatprep.subr.mxu0 %v302
        %376 = vmatpush1.msra.mxu0 %v301
        %377 = vmatprep.subr.mxu0 0.0
        %378 = vmatpush2.msra.mxu0 0.0
        %379 = vmatprep.subr.mxu0 0.0
        %380 = vmatpush2.msra.mxu0 0.0
        %381 = vmatprep.subr.mxu0 0.0
        %382 = vmatpush2.msra.mxu0 0.0
        %383 = vmatprep.subr.mxu0 0.0
        %384 = vmatpush2.msra.mxu0 0.0
        %385 = vmatprep.subr.mxu0 0.0
        %386 = vmatpush2.msra.mxu0 0.0
        %387 = vmatprep.subr.mxu0 0.0
        %388 = vmatpush2.msra.mxu0 0.0
        %389 = vmatprep.subr.mxu0 0.0
        %390 = vmatpush2.msra.mxu0 0.0
        %391 = vmatprep.subr.mxu0 0.0
        %392 = vmatpush2.msra.mxu0 0.0
        %393 = vmatprep.subr.mxu0 0.0
        %394 = vmatpush2.msra.mxu0 0.0
        %395 = vmatprep.subr.mxu0 0.0
        %396 = vmatpush2.msra.mxu0 0.0
        %397 = vmatprep.subr.mxu0 0.0
        %398 = vmatpush2.msra.mxu0 0.0
        %399 = vmatprep.subr.mxu0 0.0
        %400 = vmatpush2.msra.mxu0 0.0
        %401 = vmatprep.subr.mxu0 0.0
        %402 = vmatpush2.msra.mxu0 0.0
        %403 = vmatprep.subr.mxu0 0.0
        %404 = vmatpush2.msra.mxu0 0.0
        %405 = vmatprep.subr.mxu0 0.0
        %406 = vmatpush2.msra.mxu0 0.0
        %407 = vmatprep.subr.mxu0 0.0
        %408 = vmatpush2.msra.mxu0 0.0
        %409 = vmatprep.mubr.f32.mxu0 0.0
        %410 = vmatmul.mubr.f32.gmra.mxu0 %v300
        %v411 = vpop.f32.mrf.mxu0
        %v412 = vadd.f32 %v338, %v411
        %v413 = vpop.f32.mrf.mxu0
        %v414 = vadd.f32 %v342, %v413
        %415 = vdwg.mxu0
        %v416 = vxor.u32 %v412, 2147483648
        %v417 = vmul.f32 %v416, 1.442695
        %v418 = vpow.pop %v417
        %v419 = vadd.f32 %v418, 1.0
        %v420 = vrcp.pop %v419
        %v421 = vmul.f32 1.0, %v420
        %v422 = vmul.f32 %v412, %v421
        %v423 = vmul.f32 %v422, %v414
        %v424 = vld [vmem:[#allocation2] sm:$0xff]
        %v425 = vld [vmem:[#allocation5] sm:$0xff]
        %v426 = vld [vmem:[#allocation5 + $0x8] sm:$0xff]
        %v427 = vld [vmem:[#allocation5 + $0x10] sm:$0xff]
        %v428 = vld [vmem:[#allocation5 + $0x18] sm:$0xff]
        %v429 = vld [vmem:[#allocation5 + $0x20] sm:$0xff]
        %v430 = vld [vmem:[#allocation5 + $0x28] sm:$0xff]
        %v431 = vld [vmem:[#allocation5 + $0x30] sm:$0xff]
        %v432 = vld [vmem:[#allocation5 + $0x38] sm:$0xff]
        %v433 = vld [vmem:[#allocation5 + $0x40] sm:$0xff]
        %v434 = vld [vmem:[#allocation5 + $0x48] sm:$0xff]
        %v435 = vld [vmem:[#allocation5 + $0x50] sm:$0xff]
        %v436 = vld [vmem:[#allocation5 + $0x58] sm:$0xff]
        %v437 = vld [vmem:[#allocation5 + $0x60] sm:$0xff]
        %v438 = vld [vmem:[#allocation5 + $0x68] sm:$0xff]
        %v439 = vld [vmem:[#allocation5 + $0x70] sm:$0xff]
        %v440 = vld [vmem:[#allocation5 + $0x78] sm:$0xff]
        %441 = vmatprep.subr.mxu0 0.0
        %442 = vmatpush1.msra.mxu0 %v440
        %443 = vmatprep.subr.mxu0 0.0
        %444 = vmatpush1.msra.mxu0 %v439
        %445 = vmatprep.subr.mxu0 0.0
        %446 = vmatpush1.msra.mxu0 %v438
        %447 = vmatprep.subr.mxu0 0.0
        %448 = vmatpush1.msra.mxu0 %v437
        %449 = vmatprep.subr.mxu0 0.0
        %450 = vmatpush1.msra.mxu0 %v436
        %451 = vmatprep.subr.mxu0 0.0
        %452 = vmatpush1.msra.mxu0 %v435
        %453 = vmatprep.subr.mxu0 0.0
        %454 = vmatpush1.msra.mxu0 %v434
        %455 = vmatprep.subr.mxu0 0.0
        %456 = vmatpush1.msra.mxu0 %v433
        %457 = vmatprep.subr.mxu0 0.0
        %458 = vmatpush1.msra.mxu0 %v432
        %459 = vmatprep.subr.mxu0 0.0
        %460 = vmatpush1.msra.mxu0 %v431
        %461 = vmatprep.subr.mxu0 0.0
        %462 = vmatpush1.msra.mxu0 %v430
        %463 = vmatprep.subr.mxu0 0.0
        %464 = vmatpush1.msra.mxu0 %v429
        %465 = vmatprep.subr.mxu0 0.0
        %466 = vmatpush1.msra.mxu0 %v428
        %467 = vmatprep.subr.mxu0 0.0
        %468 = vmatpush1.msra.mxu0 %v427
        %469 = vmatprep.subr.mxu0 0.0
        %470 = vmatpush1.msra.mxu0 %v426
        %471 = vmatprep.subr.mxu0 0.0
        %472 = vmatpush1.msra.mxu0 %v425
        %473 = vmatprep.subr.mxu0 0.0
        %474 = vmatpush2.msra.mxu0 0.0
        %475 = vmatprep.subr.mxu0 0.0
        %476 = vmatpush2.msra.mxu0 0.0
        %477 = vmatprep.subr.mxu0 0.0
        %478 = vmatpush2.msra.mxu0 0.0
        %479 = vmatprep.subr.mxu0 0.0
        %480 = vmatpush2.msra.mxu0 0.0
        %481 = vmatprep.subr.mxu0 0.0
        %482 = vmatpush2.msra.mxu0 0.0
        %483 = vmatprep.subr.mxu0 0.0
        %484 = vmatpush2.msra.mxu0 0.0
        %485 = vmatprep.subr.mxu0 0.0
        %486 = vmatpush2.msra.mxu0 0.0
        %487 = vmatprep.subr.mxu0 0.0
        %488 = vmatpush2.msra.mxu0 0.0
        %489 = vmatprep.subr.mxu0 0.0
        %490 = vmatpush2.msra.mxu0 0.0
        %491 = vmatprep.subr.mxu0 0.0
        %492 = vmatpush2.msra.mxu0 0.0
        %493 = vmatprep.subr.mxu0 0.0
        %494 = vmatpush2.msra.mxu0 0.0
        %495 = vmatprep.subr.mxu0 0.0
        %496 = vmatpush2.msra.mxu0 0.0
        %497 = vmatprep.subr.mxu0 0.0
        %498 = vmatpush2.msra.mxu0 0.0
        %499 = vmatprep.subr.mxu0 0.0
        %500 = vmatpush2.msra.mxu0 0.0
        %501 = vmatprep.subr.mxu0 0.0
        %502 = vmatpush2.msra.mxu0 0.0
        %503 = vmatprep.subr.mxu0 0.0
        %504 = vmatpush2.msra.mxu0 0.0
        %505 = vmatprep.mubr.f32.mxu0 0.0
        %506 = vmatmul.mubr.f32.gmra.mxu0 %v423
        %v507 = vpop.f32.mrf.mxu0
        %v508 = vadd.f32 0.0, %v507
        %v509 = vpop.f32.mrf.mxu0
        %510 = vdwg.mxu0
        %v511 = vadd.f32 %v424, %v508
        %512 = vst [vmem:[#allocation2] sm:$0xff] %v511
        // Predicated region
        $region53: #{siglu_pallas.1} parent=39 // pred_check
          %p513 = pneg %p295
        $region54: #{siglu_pallas.1} parent=39 // pred_check_branch
          %515 = sbr.rel (%p513) target = $region56
        $region55: #{siglu_pallas.1} parent=39 // pred_region
          %v516 = vld [vmem:[#allocation2] sm:$0xff]
          %v517 = vld [vmem:[%s4] sm:$0x1]
          %v519 = vlaneseq
          %v520 = vshrl.u32 %v519, 7
          %v521 = vsub.s32 0, %v520
          %v522 = vrot.slane %v517, %v521
          %v524 = vadd.f32 %v516, %v522
          %525 = vst [vmem:[%s294] sm:$0xff] %v524
        $region56: #{siglu_pallas.1} parent=39 // pred_fallthru
          _
        %p526 = scmp.lt.s32.totalorder %s22, 1
        %s527 = scalar_select %p526, %s22, 1
        %s528 = smul.addr %s527, 8
        %s529 = scalar_lea.vmem %s5, %s528
        // Predicated region
        $region57: #{siglu_pallas.1} parent=39 // pred_check
          %p530 = pneg %p173
        $region58: #{siglu_pallas.1} parent=39 // pred_check_branch
          %532 = sbr.rel (%p530) target = $region60
        $region59: #{siglu_pallas.1} parent=39 // pred_region
          _
        $region60: #{siglu_pallas.1} parent=39 // pred_fallthru
          _
      $region40: #{siglu_pallas.1} parent=5 // pred_fallthru
        _
      %p533 = scmp.le.s32.totalorder 2, %s13
      // Predicated region
      $region61: #{siglu_pallas.1} parent=5 // pred_check
        %p534 = pneg %p533
      $region62: #{siglu_pallas.1} parent=5 // pred_check_branch
        %536 = sbr.rel (%p534) target = $region64
      $region63: #{siglu_pallas.1} parent=5 // pred_region
        %s537 = ssub.s32 %s13, 2
        // Predicated region
        $region65: #{siglu_pallas.1} parent=63 // pred_check
          %p538 = pneg %p179
        $region66: #{siglu_pallas.1} parent=63 // pred_check_branch
          %540 = sbr.rel (%p538) target = $region68
        $region67: #{siglu_pallas.1} parent=63 // pred_region
          %p541 = scmp.lt.s32.totalorder %s24, 1
          %s542 = scalar_select %p541, %s24, 1
          %s543 = smul.addr %s542, 8
          %s544 = scalar_lea.vmem %s5, %s543
        $region68: #{siglu_pallas.1} parent=63 // pred_fallthru
          _
      $region64: #{siglu_pallas.1} parent=5 // pred_fallthru
        _
    $region6: #{siglu_pallas.1} parent=1 // loop_footer
      %s17 = sadd.s32 1, %s13
    $region7: #{siglu_pallas.1} parent=1 // loop_footer_branch
      %12 = sbr.rel target = $region3
    $region8: #{siglu_pallas.1} parent=1 // loop_exit
      _
    %545 = vsyncpa [#allocation4], 1
    %s546 = scalar_lea.sflag [#allocation4], 1
    %547 = vsyncpa %s546, 1
    %548 = vsyncpa [#allocation6], 1

</llo_original>
